<compile_context>
chip_gen: v7x
topology: tpu7x:2x2x1
jax: 0.10.0
libtpu: 0.0.40
codegen_flags: <defaults>
</compile_context>

<pallas_src>
import jax
import jax.numpy as jnp
from jax.experimental import pallas as pl
from jax.experimental.pallas import tpu as pltpu

LANE = 128
SUBLANE = 8


def _round_up(n, m):
    return ((n + m - 1) // m) * m


def _augment_kernel(x_ref, g_ref, w1_ref, b1_ref, w23_ref, b23_ref, o_ref):
    # Static dims recovered from ref shapes.
    Dp = o_ref.shape[-1]                      # padded output width (lane-dense)
    Lp = w23_ref.shape[-1] - Dp               # padded latent width inside fused slab
    L = g_ref.shape[-1]                       # true latent width

    x = x_ref[...]                                                         # [tb, D] f32

    # fc1: h = relu(x @ W1 + b1)   (bf16 operands -> f32 accumulate on the MXU)
    h = jnp.dot(x.astype(jnp.bfloat16), w1_ref[...],
                preferred_element_type=jnp.float32) + b1_ref[...]
    h = jnp.maximum(h, 0.0)                                                # [tb, Hp] f32

    # fused fc2|fc3: single MXU pass, N = Lp + Dp = 256 fills the v6e/v7x MXU.
    y23 = jnp.dot(h.astype(jnp.bfloat16), w23_ref[...],
                  preferred_element_type=jnp.float32)                      # [tb, Lp+Dp]

    # gate path: fc2 logits (+bias) + gumbel noise, hard one-hot on column 0.
    logits = y23[:, :L] + b23_ref[:, :L]                                   # [tb, L]
    pert = logits + g_ref[...]                                             # [tb, L]
    m = jnp.max(pert, axis=-1, keepdims=True)                              # [tb, 1]
    # gate == 1 iff column 0 attains the row max; matches torch.argmax==0 (ties are
    # measure-zero with continuous gumbel noise).
    gate = (pert[:, 0:1] >= m).astype(jnp.float32)                         # [tb, 1]

    # gate in {0,1}: relu((h*gate)@W3 + b3) == relu(gate*(h@W3) + b3)
    y3 = y23[:, Lp:]                                                       # [tb, Dp]
    b3 = b23_ref[:, Lp:]                                                   # [1,  Dp]
    o_ref[...] = jnp.maximum(gate * y3 + b3, 0.0)                          # [tb, Dp]


def prepare_params(params):
    """Pad/transpose/cast PyTorch-style params ONCE (not per call).

    params: (w1[H,D], b1[H], w2[L,H], b2[L], w3[D,H], b3[D])  (nn.Linear layout)
    Returns (w1p bf16[D,Hp], b1p f32[1,Hp], w23p bf16[Hp,Lp+Dp], b23p f32[1,Lp+Dp])
    plus the dim tuple (D, H, L, Dp, Hp, Lp).
    """
    w1, b1, w2, b2, w3, b3 = params
    H, D = w1.shape
    L = w2.shape[0]
    Dp, Hp, Lp = _round_up(D, LANE), _round_up(H, LANE), _round_up(L, LANE)

    # fc1 RHS kept at x's true minor width D (block last dim == full array dim).
    w1p = jnp.zeros((D, Hp), jnp.bfloat16).at[:, :H].set(
        jnp.asarray(w1.T, jnp.bfloat16))
    b1p = jnp.zeros((1, Hp), jnp.float32).at[0, :H].set(jnp.asarray(b1, jnp.float32))

    # Fused [W2 | W3] RHS and [b2 | b3] bias.
    w23p = jnp.zeros((Hp, Lp + Dp), jnp.bfloat16)
    w23p = w23p.at[:H, :L].set(jnp.asarray(w2.T, jnp.bfloat16))
    w23p = w23p.at[:H, Lp:Lp + D].set(jnp.asarray(w3.T, jnp.bfloat16))
    b23p = jnp.zeros((1, Lp + Dp), jnp.float32)
    b23p = b23p.at[0, :L].set(jnp.asarray(b2, jnp.float32))
    b23p = b23p.at[0, Lp:Lp + D].set(jnp.asarray(b3, jnp.float32))

    return (w1p, b1p, w23p, b23p), (D, H, L, Dp, Hp, Lp)


def augment_net_forward(x, gumbel, prepared, dims, *, row_tile=1024):
    """x: [B, D] f32, gumbel: [B, L] f32 (same noise torch's F.gumbel_softmax adds).

    prepared/dims: output of prepare_params.  Returns [B, D] f32.
    """
    w1p, b1p, w23p, b23p = prepared
    D, H, L, Dp, Hp, Lp = dims
    B = x.shape[0]

    # Batch tile: multiple of 8 sublanes, large (amortizes per-step overhead), but
    # capped at half the padded batch so the 'parallel' grid axis keeps >= 2 steps
    # and both v7x TensorCores get work.  VMEM stays at a few MiB even at tb=2048.
    Bp8 = _round_up(B, SUBLANE)
    tb = min(row_tile, Bp8)
    if Bp8 >= 2 * SUBLANE:
        tb = min(tb, _round_up(max(Bp8 // 2, SUBLANE), SUBLANE))
    tb = max(_round_up(tb, SUBLANE), SUBLANE)
    Bp = _round_up(B, tb)

    x32 = x.astype(jnp.float32)
    g32 = gumbel.astype(jnp.float32)
    if Bp != B:
        # Batch-row pad only (no lane padding: x/gumbel stream at true minor widths).
        # Padded rows may produce nonzero outputs; they are sliced away below.
        x32 = jnp.zeros((Bp, D), jnp.float32).at[:B].set(x32)
        g32 = jnp.zeros((Bp, L), jnp.float32).at[:B].set(g32)

    grid = (Bp // tb,)
    flops = 2 * Bp * (D * Hp + Hp * (Lp + Dp))
    bytes_accessed = (Bp * D * 4 + Bp * L * 4 + Bp * Dp * 4            # streamed x/g/out
                      + w1p.size * 2 + w23p.size * 2                   # bf16 weights
                      + (b1p.size + b23p.size) * 4)                    # f32 biases

    out_p = pl.pallas_call(
        _augment_kernel,
        out_shape=jax.ShapeDtypeStruct((Bp, Dp), jnp.float32),
        grid_spec=pl.GridSpec(
            grid=grid,
            in_specs=[
                pl.BlockSpec((tb, D), lambda i: (i, 0)),            # x, true width
                pl.BlockSpec((tb, L), lambda i: (i, 0)),            # gumbel, true width
                pl.BlockSpec((D, Hp), lambda i: (0, 0)),            # w1 (VMEM-resident)
                pl.BlockSpec((1, Hp), lambda i: (0, 0)),            # b1
                pl.BlockSpec((Hp, Lp + Dp), lambda i: (0, 0)),      # [w2|w3] (resident)
                pl.BlockSpec((1, Lp + Dp), lambda i: (0, 0)),       # [b2|b3]
            ],
            out_specs=pl.BlockSpec((tb, Dp), lambda i: (i, 0)),     # lane-dense stores
        ),
        compiler_params=pltpu.CompilerParams(
            dimension_semantics=("parallel",),        # batch rows independent (v7x 2 TCs)
            vmem_limit_bytes=32 * 1024 * 1024,        # headroom for large tb on v5e
        ),
        cost_estimate=pl.CostEstimate(
            flops=flops, transcendentals=0, bytes_accessed=bytes_accessed),
    )(x32, g32, w1p, b1p, w23p, b23p)

    # Callers that keep lane-padded activations can consume out_p directly (Bp, Dp);
    # slice here to honor the unpadded [B, D] contract of the original module.
    return out_p[:B, :D]


def init_params(key, input_dim, hidden_dim, latent_dim):
    k1, k2, k3 = jax.random.split(key, 3)
    # deterministic synthetic init (shapes match nn.Linear: weight is (out, in))
    w1 = 0.1 * jax.random.normal(k1, (hidden_dim, input_dim), jnp.float32)
    b1 = jnp.full((hidden_dim,), 0.01, jnp.float32)
    w2 = 0.1 * jax.random.normal(k2, (latent_dim, hidden_dim), jnp.float32)
    b2 = jnp.full((latent_dim,), 0.01, jnp.float32)
    w3 = 0.1 * jax.random.normal(k3, (input_dim, hidden_dim), jnp.float32)
    b3 = jnp.full((input_dim,), 0.01, jnp.float32)
    return (w1, b1, w2, b2, w3, b3)


if __name__ == "__main__":
    input_dim, hidden_dim, latent_dim = 16, 32, 8
    batch = 8

    key = jax.random.PRNGKey(0)
    kx, kg, kp = jax.random.split(key, 3)

    x = jax.random.normal(kx, (batch, input_dim), jnp.float32)
    # gumbel noise as in torch's F.gumbel_softmax: -log(Exp(1))
    gumbel = -jnp.log(jax.random.exponential(kg, (batch, latent_dim), jnp.float32))

    params = init_params(kp, input_dim, hidden_dim, latent_dim)
    prepared, dims = prepare_params(params)   # pad/transpose/cast once, not per call

    out = augment_net_forward(x, gumbel, prepared, dims)
    out = jax.block_until_ready(out)

    # Pure-JAX reference with matched numerics (same bf16-quantized matmul operands,
    # f32 accumulation) so the gate decision and values are directly comparable.
    w1p, b1p, w23p, b23p = prepared
    D, H, L, Dp, Hp, Lp = dims
    h_ref = jnp.maximum(
        jnp.dot(x.astype(jnp.bfloat16), w1p, preferred_element_type=jnp.float32) + b1p,
        0.0)
    y23_ref = jnp.dot(h_ref.astype(jnp.bfloat16), w23p,
                      preferred_element_type=jnp.float32)
    pert_ref = y23_ref[:, :L] + b23p[:, :L] + gumbel
    gate_ref = (jnp.argmax(pert_ref, axis=-1) == 0).astype(jnp.float32)[:, None]
    ref = jnp.maximum(gate_ref * y23_ref[:, Lp:Lp + D] + b23p[:, Lp:Lp + D], 0.0)

    assert out.shape == (batch, input_dim)
    assert jnp.allclose(out, ref, atol=1e-4, rtol=1e-4)

    print("KERNEL_OK")
</pallas_src>

<mosaic_0001>
module attributes {stable_mosaic.version = 11 : i64} {
  func.func @_augment_kernel(%arg0: i32, %arg1: memref<8x16xf32, #tpu.memory_space<vmem>>, %arg2: memref<8x8xf32, #tpu.memory_space<vmem>>, %arg3: memref<16x128xbf16, #tpu.memory_space<vmem>>, %arg4: memref<1x128xf32, #tpu.memory_space<vmem>>, %arg5: memref<128x256xbf16, #tpu.memory_space<vmem>>, %arg6: memref<1x256xf32, #tpu.memory_space<vmem>>, %arg7: memref<8x128xf32, #tpu.memory_space<vmem>>) attributes {dimension_semantics = [#tpu.dimension_semantics<parallel>], iteration_bounds = array<i64: 1>, scalar_prefetch = 0 : i64, scratch_operands = 0 : i64, tpu.core_type = #tpu.core_type<tc>, window_params = [{transform_indices = @transform_0, window_bounds = array<i64: 8, 16>}, {transform_indices = @transform_1, window_bounds = array<i64: 8, 8>}, {pipeline_mode = #tpu.pipeline_mode<synchronous>, transform_indices = @transform_2, window_bounds = array<i64: 16, 128>}, {pipeline_mode = #tpu.pipeline_mode<synchronous>, transform_indices = @transform_3, window_bounds = array<i64: 1, 128>}, {pipeline_mode = #tpu.pipeline_mode<synchronous>, transform_indices = @transform_4, window_bounds = array<i64: 128, 256>}, {pipeline_mode = #tpu.pipeline_mode<synchronous>, transform_indices = @transform_5, window_bounds = array<i64: 1, 256>}, {transform_indices = @transform_6, window_bounds = array<i64: 8, 128>}]} {
    %c0 = arith.constant 0 : index
    %c0_0 = arith.constant 0 : index
    %0 = vector.load %arg1[%c0, %c0_0] : memref<8x16xf32, #tpu.memory_space<vmem>>, vector<8x16xf32>
    %1 = arith.truncf %0 : vector<8x16xf32> to vector<8x16xbf16>
    %c0_1 = arith.constant 0 : index
    %c0_2 = arith.constant 0 : index
    %2 = vector.load %arg3[%c0_1, %c0_2] : memref<16x128xbf16, #tpu.memory_space<vmem>>, vector<16x128xbf16>
    %cst = arith.constant dense<0.000000e+00> : vector<8x128xf32>
    %3 = tpu.matmul %1, %2, %cst {dimension_numbers = #tpu.dot_dimension_numbers<[1], [0], [0], [1], [0, 0, 1, 1], [], []>} : vector<8x16xbf16>, vector<16x128xbf16>, vector<8x128xf32> -> vector<8x128xf32>
    %c0_3 = arith.constant 0 : index
    %c0_4 = arith.constant 0 : index
    %4 = vector.load %arg4[%c0_3, %c0_4] : memref<1x128xf32, #tpu.memory_space<vmem>>, vector<1x128xf32>
    %5 = vector.broadcast %4 : vector<1x128xf32> to vector<8x128xf32>
    %6 = arith.addf %3, %5 : vector<8x128xf32>
    %cst_5 = arith.constant 0.000000e+00 : f32
    %7 = vector.broadcast %cst_5 : f32 to vector<8x128xf32>
    %8 = arith.maximumf %6, %7 : vector<8x128xf32>
    %9 = arith.truncf %8 : vector<8x128xf32> to vector<8x128xbf16>
    %c0_6 = arith.constant 0 : index
    %c0_7 = arith.constant 0 : index
    %10 = vector.load %arg5[%c0_6, %c0_7] : memref<128x256xbf16, #tpu.memory_space<vmem>>, vector<128x256xbf16>
    %cst_8 = arith.constant dense<0.000000e+00> : vector<8x256xf32>
    %11 = tpu.matmul %9, %10, %cst_8 {dimension_numbers = #tpu.dot_dimension_numbers<[1], [0], [0], [1], [0, 0, 1, 1], [], []>} : vector<8x128xbf16>, vector<128x256xbf16>, vector<8x256xf32> -> vector<8x256xf32>
    %12 = vector.extract_strided_slice %11 {offsets = [0, 0], sizes = [8, 8], strides = [1, 1]} : vector<8x256xf32> to vector<8x8xf32>
    %c0_9 = arith.constant 0 : index
    %c0_10 = arith.constant 0 : index
    %13 = vector.load %arg6[%c0_9, %c0_10] : memref<1x256xf32, #tpu.memory_space<vmem>>, vector<1x8xf32>
    %14 = vector.broadcast %13 : vector<1x8xf32> to vector<8x8xf32>
    %15 = arith.addf %12, %14 : vector<8x8xf32>
    %c0_11 = arith.constant 0 : index
    %c0_12 = arith.constant 0 : index
    %16 = vector.load %arg2[%c0_11, %c0_12] : memref<8x8xf32, #tpu.memory_space<vmem>>, vector<8x8xf32>
    %17 = arith.addf %15, %16 : vector<8x8xf32>
    %cst_13 = arith.constant dense<0xFF800000> : vector<8xf32>
    %18 = vector.multi_reduction <maximumf>, %17, %cst_13 [1] : vector<8x8xf32> to vector<8xf32>
    %19 = vector.shape_cast %18 : vector<8xf32> to vector<8x1xf32>
    %20 = vector.extract_strided_slice %17 {offsets = [0, 0], sizes = [8, 1], strides = [1, 1]} : vector<8x8xf32> to vector<8x1xf32>
    %21 = arith.cmpf oge, %20, %19 : vector<8x1xf32>
    %22 = arith.extui %21 : vector<8x1xi1> to vector<8x1xi32>
    %23 = arith.sitofp %22 : vector<8x1xi32> to vector<8x1xf32>
    %24 = vector.extract_strided_slice %11 {offsets = [0, 128], sizes = [8, 128], strides = [1, 1]} : vector<8x256xf32> to vector<8x128xf32>
    %c0_14 = arith.constant 0 : index
    %c128 = arith.constant 128 : index
    %25 = vector.load %arg6[%c0_14, %c128] : memref<1x256xf32, #tpu.memory_space<vmem>>, vector<1x128xf32>
    %26 = vector.broadcast %23 : vector<8x1xf32> to vector<8x128xf32>
    %27 = arith.mulf %26, %24 : vector<8x128xf32>
    %28 = vector.broadcast %25 : vector<1x128xf32> to vector<8x128xf32>
    %29 = arith.addf %27, %28 : vector<8x128xf32>
    %cst_15 = arith.constant 0.000000e+00 : f32
    %30 = vector.broadcast %cst_15 : f32 to vector<8x128xf32>
    %31 = arith.maximumf %29, %30 : vector<8x128xf32>
    %c0_16 = arith.constant 0 : index
    %c0_17 = arith.constant 0 : index
    %32 = vector.load %arg7[%c0_16, %c0_17] : memref<8x128xf32, #tpu.memory_space<vmem>>, vector<8x128xf32>
    tpu.vector_store %arg7[%c0_16, %c0_17], %31 {strides = array<i32>} : memref<8x128xf32, #tpu.memory_space<vmem>>, vector<8x128xf32>,
    return
  }
  func.func @transform_0(%arg0: i32) -> (i32, i32) {
    %c0_i32 = arith.constant 0 : i32
    %c0_i32_0 = arith.constant 0 : i32
    return %arg0, %c0_i32 : i32, i32
  }
  func.func @transform_1(%arg0: i32) -> (i32, i32) {
    %c0_i32 = arith.constant 0 : i32
    %c0_i32_0 = arith.constant 0 : i32
    return %arg0, %c0_i32 : i32, i32
  }
  func.func @transform_2(%arg0: i32) -> (i32, i32) {
    %c0_i32 = arith.constant 0 : i32
    %c0_i32_0 = arith.constant 0 : i32
    %c0_i32_1 = arith.constant 0 : i32
    return %c0_i32, %c0_i32_0 : i32, i32
  }
  func.func @transform_3(%arg0: i32) -> (i32, i32) {
    %c0_i32 = arith.constant 0 : i32
    %c0_i32_0 = arith.constant 0 : i32
    %c0_i32_1 = arith.constant 0 : i32
    return %c0_i32, %c0_i32_0 : i32, i32
  }
  func.func @transform_4(%arg0: i32) -> (i32, i32) {
    %c0_i32 = arith.constant 0 : i32
    %c0_i32_0 = arith.constant 0 : i32
    %c0_i32_1 = arith.constant 0 : i32
    return %c0_i32, %c0_i32_0 : i32, i32
  }
  func.func @transform_5(%arg0: i32) -> (i32, i32) {
    %c0_i32 = arith.constant 0 : i32
    %c0_i32_0 = arith.constant 0 : i32
    %c0_i32_1 = arith.constant 0 : i32
    return %c0_i32, %c0_i32_0 : i32, i32
  }
  func.func @transform_6(%arg0: i32) -> (i32, i32) {
    %c0_i32 = arith.constant 0 : i32
    %c0_i32_0 = arith.constant 0 : i32
    return %arg0, %c0_i32 : i32, i32
  }
}

</mosaic_0001>

<llo_original>
// kernel: tpu_custom_call.1
$region0: #{tpu_custom_call.1}
  #allocation0 [shape = 'u32[]', space=smem, size = 0x4, offset = 0x4, fixed_abs, tag = 'smem constant byte address 0x4 - core index']
  #allocation1 [shape = 'u32[144,128]{1,0:T(1,128)}', space=vmem, size = 0x12000, scoped, tag = 'internal scratch']
  %s0 = inlined_call_operand.hbm [shape: f32[8,16], index: 0, kind: input, shape index: {}]
  %s1 = inlined_call_operand.hbm [shape: f32[8,8], index: 1, kind: input, shape index: {}]
  %s2 = inlined_call_operand.hbm [shape: bf16[16,128], index: 2, kind: input, shape index: {}]
  %s3 = inlined_call_operand.vmem [shape: f32[1,128], index: 3, kind: input, shape index: {}]
  %s4 = inlined_call_operand.hbm [shape: bf16[128,256], index: 4, kind: input, shape index: {}]
  %s5 = inlined_call_operand.vmem [shape: f32[1,256], index: 5, kind: input, shape index: {}]
  %s6 = inlined_call_operand.hbm [shape: f32[8,128], index: 6, kind: output, shape index: {}]
  %s7 = sld [smem:[#allocation0]]
  $region50: #{tpu_custom_call.1} parent=0
    _
  %s9 = ssub.s32 1, %s7
  %s10 = scalar_select 0, %s9, %s7
  $region1: #{tpu_custom_call.1} parent=0
    #allocation2 [shape = 'u8[4096]{0}', space=vmem, size = 0x1000, scoped, tag = 'input window, operand 0, single buffered']
    #allocation3 [shape = 's32[1]{0}', space=sflag, size = 0x4, scoped, tag = 'scoped memory for tpu_custom_call.1']
    #allocation4 [shape = 's32[1]{0}', space=sflag, size = 0x4, scoped, tag = 'scoped memory for tpu_custom_call.1']
    #allocation5 [shape = 'u8[4096]{0}', space=vmem, size = 0x1000, scoped, tag = 'input window, operand 1, single buffered']
    #allocation6 [shape = 's32[1]{0}', space=sflag, size = 0x4, scoped, tag = 'scoped memory for tpu_custom_call.1']
    #allocation7 [shape = 'u8[4096]{0}', space=vmem, size = 0x1000, scoped, tag = 'input window, operand 2, single buffered']
    #allocation8 [shape = 'u8[65536]{0}', space=vmem, size = 0x10000, scoped, tag = 'input window, operand 4, single buffered']
    #allocation9 [shape = 's32[1]{0}', space=sflag, size = 0x4, scoped, tag = 'scoped memory for tpu_custom_call.1']
    #allocation10 [shape = 'u8[4096]{0}', space=vmem, size = 0x1000, scoped, tag = 'output window, operand 0, single buffered']
    %11 = vsyncpa [#allocation3], 0
    %12 = vsyncpa [#allocation6], 0
    %13 = vsyncpa [#allocation9], 0
    %14 = vsyncpa [#allocation4], 0
    // Predicated region
    $region2: #{tpu_custom_call.1} parent=1 // pred_check
      _
    $region3: #{tpu_custom_call.1} parent=1 // pred_check_branch
      %16 = sbr.rel (0) target = $region5
    $region4: #{tpu_custom_call.1} parent=1 // pred_region
      %s18 = ssub.s32 128, 128
      %19 = vsyncadd [#allocation3], %s18
      %s21 = sshll.u32 [#allocation2], 4
      %s22 = int_to_ptr.vmem [resolvable:$true] %s21
      %24 = dma.hbm_to_vmem [thread:$0]  %s0, 128, %s22, [#allocation3]
    $region5: #{tpu_custom_call.1} parent=1 // pred_fallthru
      _
    // Predicated region
    $region6: #{tpu_custom_call.1} parent=1 // pred_check
      _
    $region7: #{tpu_custom_call.1} parent=1 // pred_check_branch
      %26 = sbr.rel (0) target = $region9
    $region8: #{tpu_custom_call.1} parent=1 // pred_region
      %s28 = ssub.s32 128, 128
      %29 = vsyncadd [#allocation6], %s28
      %s31 = sshll.u32 [#allocation5], 4
      %s32 = int_to_ptr.vmem [resolvable:$true] %s31
      %34 = dma.hbm_to_vmem [thread:$0]  %s1, 128, %s32, [#allocation6]
    $region9: #{tpu_custom_call.1} parent=1 // pred_fallthru
      _
    // Predicated region
    $region10: #{tpu_custom_call.1} parent=1 // pred_check
      _
    $region11: #{tpu_custom_call.1} parent=1 // pred_check_branch
      %36 = sbr.rel (0) target = $region13
    $region12: #{tpu_custom_call.1} parent=1 // pred_region
      %s38 = ssub.s32 128, 128
      %39 = vsyncadd [#allocation6], %s38
      %s40 = sshll.u32 [#allocation7], 4
      %s41 = int_to_ptr.vmem [resolvable:$true] %s40
      %46 = dma.hbm_to_vmem [thread:$0]  %s2, 128, %s41, [#allocation6], 64, 64, 4
    $region13: #{tpu_custom_call.1} parent=1 // pred_fallthru
      _
    // Predicated region
    $region14: #{tpu_custom_call.1} parent=1 // pred_check
      _
    $region15: #{tpu_custom_call.1} parent=1 // pred_check_branch
      %48 = sbr.rel (0) target = $region17
    $region16: #{tpu_custom_call.1} parent=1 // pred_region
      _
    $region17: #{tpu_custom_call.1} parent=1 // pred_fallthru
      _
    // Predicated region
    $region18: #{tpu_custom_call.1} parent=1 // pred_check
      _
    $region19: #{tpu_custom_call.1} parent=1 // pred_check_branch
      %50 = sbr.rel (0) target = $region21
    $region20: #{tpu_custom_call.1} parent=1 // pred_region
      %s52 = ssub.s32 2048, 2048
      %53 = vsyncadd [#allocation9], %s52
      %s54 = sshll.u32 [#allocation8], 4
      %s55 = int_to_ptr.vmem [resolvable:$true] %s54
      %60 = dma.hbm_to_vmem [thread:$0]  %s4, 2048, %s55, [#allocation9], 128, 128, 8
    $region21: #{tpu_custom_call.1} parent=1 // pred_fallthru
      _
    // Predicated region
    $region22: #{tpu_custom_call.1} parent=1 // pred_check
      _
    $region23: #{tpu_custom_call.1} parent=1 // pred_check_branch
      %62 = sbr.rel (0) target = $region25
    $region24: #{tpu_custom_call.1} parent=1 // pred_region
      _
    $region25: #{tpu_custom_call.1} parent=1 // pred_fallthru
      _
    // Predicated region
    $region26: #{tpu_custom_call.1} parent=1 // pred_check
      _
    $region27: #{tpu_custom_call.1} parent=1 // pred_check_branch
      %64 = sbr.rel (0) target = $region29
    $region28: #{tpu_custom_call.1} parent=1 // pred_region
      %65 = dma.done [#allocation3], 128
    $region29: #{tpu_custom_call.1} parent=1 // pred_fallthru
      _
    // Predicated region
    $region30: #{tpu_custom_call.1} parent=1 // pred_check
      _
    $region31: #{tpu_custom_call.1} parent=1 // pred_check_branch
      %67 = sbr.rel (0) target = $region33
    $region32: #{tpu_custom_call.1} parent=1 // pred_region
      %68 = dma.done [#allocation6], 128
    $region33: #{tpu_custom_call.1} parent=1 // pred_fallthru
      _
    // Predicated region
    $region34: #{tpu_custom_call.1} parent=1 // pred_check
      _
    $region35: #{tpu_custom_call.1} parent=1 // pred_check_branch
      %70 = sbr.rel (0) target = $region37
    $region36: #{tpu_custom_call.1} parent=1 // pred_region
      %71 = dma.done [#allocation6], 128
    $region37: #{tpu_custom_call.1} parent=1 // pred_fallthru
      _
    // Predicated region
    $region38: #{tpu_custom_call.1} parent=1 // pred_check
      _
    $region39: #{tpu_custom_call.1} parent=1 // pred_check_branch
      %73 = sbr.rel (0) target = $region41
    $region40: #{tpu_custom_call.1} parent=1 // pred_region
      %74 = dma.done [#allocation9], 2048
    $region41: #{tpu_custom_call.1} parent=1 // pred_fallthru
      _
    %v76 = vld [vmem:[#allocation2] sm:$0xff]
    %v77 = vpack.c.bf16 %v76, %v76
    %v78 = vld [vmem:[#allocation7] sm:$0xf]
    %v79 = vld [vmem:[#allocation7 + $0x4] sm:$0xf]
    %v80 = vld [vmem:[%s3] sm:$0x1]
    %v82 = vlaneseq
    %v83 = vshrl.u32 %v82, 7
    %v84 = vsub.s32 0, %v83
    %v85 = vrot.slane %v80, %v84
    %v89 = vunpack.c.l.b16 %v78
    %v90 = vunpack.c.l.b16 %v79
    %v91 = vpack.c.b16 %v90, %v89
    %vm93 = vcmask 130048
    %v95 = vsel %vm93, %v77, 0
    %97 = vmatprep.subr.bf16.mxu0 0
    %98 = vmatpush1.bf16.msra.mxu0 %v91
    %99 = vmatprep.subr.bf16.mxu0 0
    %100 = vmatpush1.bf16.msra.mxu0 0
    %101 = vmatprep.subr.bf16.mxu0 0
    %102 = vmatpush1.bf16.msra.mxu0 0
    %103 = vmatprep.subr.bf16.mxu0 0
    %104 = vmatpush1.bf16.msra.mxu0 0
    %105 = vmatprep.subr.bf16.mxu0 0
    %106 = vmatpush1.bf16.msra.mxu0 0
    %107 = vmatprep.subr.bf16.mxu0 0
    %108 = vmatpush1.bf16.msra.mxu0 0
    %109 = vmatprep.subr.bf16.mxu0 0
    %110 = vmatpush1.bf16.msra.mxu0 0
    %111 = vmatprep.subr.bf16.mxu0 0
    %112 = vmatpush1.bf16.msra.mxu0 0
    %113 = vmatprep.subr.bf16.mxu0 0
    %114 = vmatpush1.bf16.msra.mxu0 0
    %115 = vmatprep.subr.bf16.mxu0 0
    %116 = vmatpush1.bf16.msra.mxu0 0
    %117 = vmatprep.subr.bf16.mxu0 0
    %118 = vmatpush1.bf16.msra.mxu0 0
    %119 = vmatprep.subr.bf16.mxu0 0
    %120 = vmatpush1.bf16.msra.mxu0 0
    %121 = vmatprep.subr.bf16.mxu0 0
    %122 = vmatpush1.bf16.msra.mxu0 0
    %123 = vmatprep.subr.bf16.mxu0 0
    %124 = vmatpush1.bf16.msra.mxu0 0
    %125 = vmatprep.subr.bf16.mxu0 0
    %126 = vmatpush1.bf16.msra.mxu0 0
    %127 = vmatprep.subr.bf16.mxu0 0
    %128 = vmatpush1.bf16.msra.mxu0 0
    %129 = vmatprep.mubr.bf16.mxu0 0
    %130 = vmatmul.mubr.bf16.gmra.mrb[0].mxu0 %v95
    %v131 = vpop.f32.mrb[0].mxu0
    %v132 = vadd.f32 %v85, %v131
    %v133 = vpop.f32.mrb[0].mxu0
    %v134 = vpop.f32.mrb[0].mxu0
    %v135 = vpop.f32.mrb[0].mxu0
    %136 = vdwg.mxu0
    %v137 = vmax.f32 %v132, 0.0
    %v138 = vpack.c.bf16 %v137, %v137
    %v139 = vld [vmem:[#allocation8] sm:$0xff]
    %v140 = vld [vmem:[#allocation8 + $0x8] sm:$0xff]
    %v141 = vld [vmem:[#allocation8 + $0x10] sm:$0xff]
    %v142 = vld [vmem:[#allocation8 + $0x18] sm:$0xff]
    %v143 = vld [vmem:[#allocation8 + $0x20] sm:$0xff]
    %v144 = vld [vmem:[#allocation8 + $0x28] sm:$0xff]
    %v145 = vld [vmem:[#allocation8 + $0x30] sm:$0xff]
    %v146 = vld [vmem:[#allocation8 + $0x38] sm:$0xff]
    %v147 = vld [vmem:[#allocation8 + $0x40] sm:$0xff]
    %v148 = vld [vmem:[#allocation8 + $0x48] sm:$0xff]
    %v149 = vld [vmem:[#allocation8 + $0x50] sm:$0xff]
    %v150 = vld [vmem:[#allocation8 + $0x58] sm:$0xff]
    %v151 = vld [vmem:[#allocation8 + $0x60] sm:$0xff]
    %v152 = vld [vmem:[#allocation8 + $0x68] sm:$0xff]
    %v153 = vld [vmem:[#allocation8 + $0x70] sm:$0xff]
    %v154 = vld [vmem:[#allocation8 + $0x78] sm:$0xff]
    %v171 = vunpack.c.l.b16 %v139
    %v172 = vunpack.c.h.b16 %v139
    %v173 = vunpack.c.l.b16 %v140
    %v174 = vunpack.c.h.b16 %v140
    %v175 = vunpack.c.l.b16 %v141
    %v176 = vunpack.c.h.b16 %v141
    %v177 = vunpack.c.l.b16 %v142
    %v178 = vunpack.c.h.b16 %v142
    %v179 = vunpack.c.l.b16 %v143
    %v180 = vunpack.c.h.b16 %v143
    %v181 = vunpack.c.l.b16 %v144
    %v182 = vunpack.c.h.b16 %v144
    %v183 = vunpack.c.l.b16 %v145
    %v184 = vunpack.c.h.b16 %v145
    %v185 = vunpack.c.l.b16 %v146
    %v186 = vunpack.c.h.b16 %v146
    %v187 = vunpack.c.l.b16 %v147
    %v188 = vunpack.c.h.b16 %v147
    %v189 = vunpack.c.l.b16 %v148
    %v190 = vunpack.c.h.b16 %v148
    %v191 = vunpack.c.l.b16 %v149
    %v192 = vunpack.c.h.b16 %v149
    %v193 = vunpack.c.l.b16 %v150
    %v194 = vunpack.c.h.b16 %v150
    %v195 = vunpack.c.l.b16 %v151
    %v196 = vunpack.c.h.b16 %v151
    %v197 = vunpack.c.l.b16 %v152
    %v198 = vunpack.c.h.b16 %v152
    %v199 = vunpack.c.l.b16 %v153
    %v200 = vunpack.c.h.b16 %v153
    %v201 = vunpack.c.l.b16 %v154
    %v202 = vunpack.c.h.b16 %v154
    %v203 = vpack.c.b16 %v173, %v171
    %v204 = vpack.c.b16 %v174, %v172
    %v205 = vpack.c.b16 %v177, %v175
    %v206 = vpack.c.b16 %v178, %v176
    %v207 = vpack.c.b16 %v181, %v179
    %v208 = vpack.c.b16 %v182, %v180
    %v209 = vpack.c.b16 %v185, %v183
    %v210 = vpack.c.b16 %v186, %v184
    %v211 = vpack.c.b16 %v189, %v187
    %v212 = vpack.c.b16 %v190, %v188
    %v213 = vpack.c.b16 %v193, %v191
    %v214 = vpack.c.b16 %v194, %v192
    %v215 = vpack.c.b16 %v197, %v195
    %v216 = vpack.c.b16 %v198, %v196
    %v217 = vpack.c.b16 %v201, %v199
    %v218 = vpack.c.b16 %v202, %v200
    %235 = vmatprep.subr.bf16.mxu0 %v204
    %236 = vmatpush1.bf16.msra.mxu0 %v203
    %237 = vmatprep.subr.bf16.mxu0 %v206
    %238 = vmatpush1.bf16.msra.mxu0 %v205
    %239 = vmatprep.subr.bf16.mxu0 %v208
    %240 = vmatpush1.bf16.msra.mxu0 %v207
    %241 = vmatprep.subr.bf16.mxu0 %v210
    %242 = vmatpush1.bf16.msra.mxu0 %v209
    %243 = vmatprep.subr.bf16.mxu0 %v212
    %244 = vmatpush1.bf16.msra.mxu0 %v211
    %245 = vmatprep.subr.bf16.mxu0 %v214
    %246 = vmatpush1.bf16.msra.mxu0 %v213
    %247 = vmatprep.subr.bf16.mxu0 %v216
    %248 = vmatpush1.bf16.msra.mxu0 %v215
    %249 = vmatprep.subr.bf16.mxu0 %v218
    %250 = vmatpush1.bf16.msra.mxu0 %v217
    %251 = vmatprep.subr.bf16.mxu0 0
    %252 = vmatpush1.bf16.msra.mxu0 0
    %253 = vmatprep.subr.bf16.mxu0 0
    %254 = vmatpush1.bf16.msra.mxu0 0
    %255 = vmatprep.subr.bf16.mxu0 0
    %256 = vmatpush1.bf16.msra.mxu0 0
    %257 = vmatprep.subr.bf16.mxu0 0
    %258 = vmatpush1.bf16.msra.mxu0 0
    %259 = vmatprep.subr.bf16.mxu0 0
    %260 = vmatpush1.bf16.msra.mxu0 0
    %261 = vmatprep.subr.bf16.mxu0 0
    %262 = vmatpush1.bf16.msra.mxu0 0
    %263 = vmatprep.subr.bf16.mxu0 0
    %264 = vmatpush1.bf16.msra.mxu0 0
    %265 = vmatprep.subr.bf16.mxu0 0
    %266 = vmatpush1.bf16.msra.mxu0 0
    %267 = vmatprep.mubr.bf16.mxu0 0
    %268 = vmatmul.mubr.bf16.gmra.mrb[0].mxu0 %v138
    %v269 = vpop.f32.mrb[0].mxu0
    %v270 = vadd.f32 0.0, %v269
    %v271 = vpop.f32.mrb[0].mxu0
    %v272 = vadd.f32 0.0, %v271
    %v273 = vpop.f32.mrb[0].mxu0
    %v274 = vpop.f32.mrb[0].mxu0
    %275 = vdwg.mxu0
    %v276 = vld [vmem:[%s5] sm:$0x1]
    %v278 = vlaneseq
    %v279 = vshrl.u32 %v278, 7
    %v280 = vsub.s32 0, %v279
    %v281 = vrot.slane %v276, %v280
    %v283 = vadd.f32 %v270, %v281
    %v284 = vld [vmem:[#allocation5] sm:$0xff]
    %v285 = vadd.f32 %v283, %v284
    %vm286 = vcmask 64512
    %v287 = vsel %vm286, %v285, -inf
    %288 = vmax.xlane.f32.xlu0 %v287
    %v289 = vpop.xlane.xlu0 %288
    %vm290 = vcmp.ge.f32.partialorder %v285, %v289
    %v291 = vsel %vm290, 1, 0
    %v292 = vcvt.s32.f32 %v291
    %v293 = vld [vmem:[%s5 + $0x1] sm:$0x1]
    %295 = vset.pattern.permute.xlu0 0
    %296 = vperm.xlu0 %295, %v292
    %v297 = vpop.permute.xlu0 %296
    %v299 = vmul.f32 %v297, %v272
    %v301 = vlaneseq
    %v302 = vshrl.u32 %v301, 7
    %v303 = vsub.s32 0, %v302
    %v304 = vrot.slane %v293, %v303
    %v306 = vadd.f32 %v299, %v304
    %v307 = vmax.f32 %v306, 0.0
    %308 = vst [vmem:[#allocation10] sm:$0xff] %v307
    // Predicated region
    $region42: #{tpu_custom_call.1} parent=1 // pred_check
      _
    $region43: #{tpu_custom_call.1} parent=1 // pred_check_branch
      %310 = sbr.rel (0) target = $region45
    $region44: #{tpu_custom_call.1} parent=1 // pred_region
      %s312 = ssub.s32 128, 128
      %313 = vsyncadd [#allocation4], %s312
      %s315 = sshll.u32 [#allocation10], 4
      %s316 = int_to_ptr.vmem [resolvable:$true] %s315
      %318 = dma.vmem_to_hbm [thread:$0]  %s316, 128, %s6, [#allocation4]
    $region45: #{tpu_custom_call.1} parent=1 // pred_fallthru
      _
    // Predicated region
    $region46: #{tpu_custom_call.1} parent=1 // pred_check
      _
    $region47: #{tpu_custom_call.1} parent=1 // pred_check_branch
      %320 = sbr.rel (0) target = $region49
    $region48: #{tpu_custom_call.1} parent=1 // pred_region
      %321 = dma.done [#allocation4], 128
    $region49: #{tpu_custom_call.1} parent=1 // pred_fallthru
      _
    %322 = vsyncpa [#allocation3], 1
    %323 = vsyncpa [#allocation6], 1
    %324 = vsyncpa [#allocation9], 1
    %325 = vsyncpa [#allocation4], 1

</llo_original>
